<compile_context>
chip_gen: v7x
topology: tpu7x:2x2x1
jax: 0.10.0
libtpu: 0.0.40
codegen_flags: <defaults>
</compile_context>

<pallas_src>
import jax
import jax.numpy as jnp
from jax import lax
from jax.experimental import pallas as pl
from jax.experimental.pallas import tpu as pltpu

B, L = 2, 8          # batch, sequence length (L == 8 keeps in-kernel reshapes sublane aligned)
V = 128              # toy vocab size (== one vreg lane width)
D = 32               # hidden size
CLASSES = ["anagram", "hidden", "container", "charade",
           "double", "homophone", "deletion", "reversal"]
C = len(CLASSES)     # number of clue-type classes == number of adapter LM heads


def _argmax_last(logits, num, keepdims):
    """First-occurrence argmax along the last axis (matches torch.argmax tie-breaking)."""
    iota = lax.broadcasted_iota(jnp.int32, logits.shape, logits.ndim - 1)
    maxv = jnp.max(logits, axis=-1, keepdims=True)
    return jnp.min(jnp.where(logits == maxv, iota, num), axis=-1, keepdims=keepdims)


# ---------------------------------------------------------------------------
# Fused kernel: embedding -> classifier (masked mean pool + linear + argmax)
#               -> in-kernel adapter-head selection from clue_idx[0]
#               -> toy frozen-T5 encoder FFN -> selected LM head -> greedy argmax
# ---------------------------------------------------------------------------
def solver_kernel(ids_ref, maskf_ref, mask2_ref, emb_ref, wcls_ref, bcls_ref,
                  wenc_ref, benc_ref, whead_ref,
                  tok_ref, clue_ref, logits_ref):
    # ---- shared token embedding: one-hot @ emb on the MXU (bf16 in, f32 acc) ----
    # TODO(synk): the (B*L, V) one-hot only scales because V == 128 (one vreg wide);
    #   for a realistic vocab switch to a row gather (jnp.take / pl.Element BlockSpec).
    iota_v = lax.broadcasted_iota(jnp.int32, (B * L, V), 1)
    onehot = (iota_v == ids_ref[...]).astype(jnp.bfloat16)                       # (B*L, V)
    x = jnp.dot(onehot, emb_ref[...], preferred_element_type=jnp.float32)        # (B*L, D) f32

    maskf = maskf_ref[...]                                                        # (B*L, 1) f32
    xm = x * maskf                                                                # mask applied to embeddings

    # ---- classifier: vectorized masked mean pooling + ONE (B,D)@(D,C) matmul ----
    xm3 = xm.reshape(B, L, D)                                                     # sublane-aligned split (L == 8)
    pooled_num = jnp.sum(xm3, axis=1)                                             # (B, D)   XLU sublane reduce
    denom = jnp.maximum(jnp.sum(mask2_ref[...], axis=-1, keepdims=True), 1.0)     # (B, 1)
    pooled = (pooled_num / denom).astype(jnp.bfloat16)                            # (B, D)
    cls_logits = jnp.dot(pooled, wcls_ref[...],
                         preferred_element_type=jnp.float32) + bcls_ref[...]      # (B, C) f32
    clue_idx = _argmax_last(cls_logits, C, keepdims=True)                         # (B, 1) int32
    logits_ref[...] = cls_logits
    clue_ref[...] = clue_idx

    # ---- adapter selection: set_active_adapters(clue_type[0]) ----
    # One-hot select over the C axis of the resident (C, D, V) head stack; only
    # the selected head is non-zero so the bf16 multiply+sum is exact.
    clue0 = clue_idx[0:1, 0:1].reshape(1, 1, 1)                                   # (1,1,1) int32
    sel = (lax.broadcasted_iota(jnp.int32, (C, 1, 1), 0) == clue0)                # (C,1,1) bool
    head = jnp.sum(whead_ref[...] * sel.astype(whead_ref.dtype), axis=0)          # (D, V) bf16

    # ---- toy frozen-T5 encoder FFN + selected seq2seq LM head + greedy decode ----
    h = jnp.maximum(
        jnp.dot(xm.astype(jnp.bfloat16), wenc_ref[...],
                preferred_element_type=jnp.float32) + benc_ref[...], 0.0)         # (B*L, D) f32
    gen_logits = jnp.dot(h.astype(jnp.bfloat16), head,
                         preferred_element_type=jnp.float32)                      # (B*L, V) f32
    tok_ref[...] = _argmax_last(gen_logits.reshape(B, L, V), V, keepdims=False)   # (B, L) int32


def cryptic_solver_forward(ids, mask, emb, w_cls, b_cls, w_enc, b_enc, w_head):
    ids2 = ids.reshape(B * L, 1).astype(jnp.int32)      # host glue: layout for lane-broadcast compare
    maskf = mask.reshape(B * L, 1).astype(jnp.float32)  # per-token mask column
    mask2 = mask.astype(jnp.float32)                    # (B, L) for the pooling denominator

    vmem = lambda: pl.BlockSpec(memory_space=pltpu.MemorySpace.VMEM)
    tokens, clue_idx, clue_logits = pl.pallas_call(
        solver_kernel,
        out_shape=(jax.ShapeDtypeStruct((B, L), jnp.int32),
                   jax.ShapeDtypeStruct((B, 1), jnp.int32),
                   jax.ShapeDtypeStruct((B, C), jnp.float32)),
        # No grid: everything (< 300 KiB) is resident in VMEM and the kernel runs once.
        in_specs=[vmem() for _ in range(9)],
        out_specs=(vmem(), vmem(), vmem()),
    )(ids2, maskf, mask2, emb, w_cls, b_cls, w_enc, b_enc, w_head)
    return tokens, clue_idx, clue_logits


# ---------------------------------------------------------------------------
# Wrapper mirroring CrypticCrosswordSolver.forward
# ---------------------------------------------------------------------------
class CrypticCrosswordSolverPallas:
    def __init__(self, key):
        k = jax.random.split(key, 4)
        s = jnp.float32(0.02)
        # bf16 weights = native MXU input format on v5e/v6e/v7x; biases stay f32.
        self.emb = (jax.random.normal(k[0], (V, D), jnp.float32) * s).astype(jnp.bfloat16)
        self.w_cls = (jax.random.normal(k[1], (D, C), jnp.float32) * s).astype(jnp.bfloat16)
        self.b_cls = jnp.zeros((1, C), jnp.float32)
        self.w_enc = (jax.random.normal(k[2], (D, D), jnp.float32) * s).astype(jnp.bfloat16)
        self.b_enc = jnp.zeros((1, D), jnp.float32)
        self.w_head = (jax.random.normal(k[3], (C, D, V), jnp.float32) * s).astype(jnp.bfloat16)
        self.classes = CLASSES

    def __call__(self, ids, mask, topk=1):
        # TODO(synk): string tokenization / detokenization (T5Tokenizer) has no Pallas
        #   equivalent; this forward consumes and returns integer token ids directly.
        # TODO(synk): beam search (num_beams=topk, num_return_sequences=topk) not
        #   implemented; greedy single-sequence decoding (topk == 1) only.
        return cryptic_solver_forward(ids, mask, self.emb, self.w_cls, self.b_cls,
                                      self.w_enc, self.b_enc, self.w_head)


if __name__ == "__main__":
    key = jax.random.PRNGKey(0)
    k_ids, k_params = jax.random.split(key)
    # "tokenized" deterministic inputs (stand-in for tokenizer.tokenize(x))
    ids = jax.random.randint(k_ids, (B, L), 1, V, dtype=jnp.int32)
    mask = jnp.ones((B, L), jnp.float32)

    solver = CrypticCrosswordSolverPallas(k_params)
    tokens, clue_idx, clue_logits = solver(ids, mask, topk=1)
    jax.block_until_ready((tokens, clue_idx, clue_logits))

    # mirror Class_vocab.batch_get_class on the host (glue, not kernel work)
    _clue_names = [CLASSES[int(i)] for i in clue_idx[:, 0]]

    assert tokens.shape == (B, L) and tokens.dtype == jnp.int32
    assert clue_idx.shape == (B, 1) and clue_idx.dtype == jnp.int32
    assert clue_logits.shape == (B, C) and clue_logits.dtype == jnp.float32
    print("KERNEL_OK")
</pallas_src>

<mosaic_0001>
module attributes {stable_mosaic.version = 11 : i64} {
  func.func @solver_kernel(%arg0: memref<16x1xi32, #tpu.memory_space<vmem>>, %arg1: memref<16x1xf32, #tpu.memory_space<vmem>>, %arg2: memref<2x8xf32, #tpu.memory_space<vmem>>, %arg3: memref<128x32xbf16, #tpu.memory_space<vmem>>, %arg4: memref<32x8xbf16, #tpu.memory_space<vmem>>, %arg5: memref<1x8xf32, #tpu.memory_space<vmem>>, %arg6: memref<32x32xbf16, #tpu.memory_space<vmem>>, %arg7: memref<1x32xf32, #tpu.memory_space<vmem>>, %arg8: memref<8x32x128xbf16, #tpu.memory_space<vmem>>, %arg9: memref<2x8xi32, #tpu.memory_space<vmem>>, %arg10: memref<2x1xi32, #tpu.memory_space<vmem>>, %arg11: memref<2x8xf32, #tpu.memory_space<vmem>>) attributes {dimension_semantics = [], scalar_prefetch = 0 : i64, scratch_operands = 0 : i64, tpu.core_type = #tpu.core_type<tc>} {
    %0 = tpu.iota {dimensions = array<i32: 1>} : vector<16x128xi32>
    %c0 = arith.constant 0 : index
    %c0_0 = arith.constant 0 : index
    %1 = vector.load %arg0[%c0, %c0_0] : memref<16x1xi32, #tpu.memory_space<vmem>>, vector<16x1xi32>
    %2 = vector.broadcast %1 : vector<16x1xi32> to vector<16x128xi32>
    %3 = arith.cmpi eq, %0, %2 : vector<16x128xi32>
    %4 = arith.extui %3 : vector<16x128xi1> to vector<16x128xi32>
    %5 = arith.sitofp %4 : vector<16x128xi32> to vector<16x128xf32>
    %6 = arith.truncf %5 : vector<16x128xf32> to vector<16x128xbf16>
    %c0_1 = arith.constant 0 : index
    %c0_2 = arith.constant 0 : index
    %7 = vector.load %arg3[%c0_1, %c0_2] : memref<128x32xbf16, #tpu.memory_space<vmem>>, vector<128x32xbf16>
    %cst = arith.constant dense<0.000000e+00> : vector<16x32xf32>
    %8 = tpu.matmul %6, %7, %cst {dimension_numbers = #tpu.dot_dimension_numbers<[1], [0], [0], [1], [0, 0, 1, 1], [], []>} : vector<16x128xbf16>, vector<128x32xbf16>, vector<16x32xf32> -> vector<16x32xf32>
    %c0_3 = arith.constant 0 : index
    %c0_4 = arith.constant 0 : index
    %9 = vector.load %arg1[%c0_3, %c0_4] : memref<16x1xf32, #tpu.memory_space<vmem>>, vector<16x1xf32>
    %10 = vector.broadcast %9 : vector<16x1xf32> to vector<16x32xf32>
    %11 = arith.mulf %8, %10 : vector<16x32xf32>
    %12 = vector.shape_cast %11 : vector<16x32xf32> to vector<2x8x32xf32>
    %cst_5 = arith.constant dense<0.000000e+00> : vector<2x32xf32>
    %13 = vector.multi_reduction <add>, %12, %cst_5 [1] : vector<2x8x32xf32> to vector<2x32xf32>
    %c0_6 = arith.constant 0 : index
    %c0_7 = arith.constant 0 : index
    %14 = vector.load %arg2[%c0_6, %c0_7] : memref<2x8xf32, #tpu.memory_space<vmem>>, vector<2x8xf32>
    %cst_8 = arith.constant dense<0.000000e+00> : vector<2xf32>
    %15 = vector.multi_reduction <add>, %14, %cst_8 [1] : vector<2x8xf32> to vector<2xf32>
    %16 = vector.shape_cast %15 : vector<2xf32> to vector<2x1xf32>
    %cst_9 = arith.constant 1.000000e+00 : f32
    %17 = vector.broadcast %cst_9 : f32 to vector<2x1xf32>
    %18 = arith.maximumf %16, %17 : vector<2x1xf32>
    %19 = vector.broadcast %18 : vector<2x1xf32> to vector<2x32xf32>
    %20 = arith.divf %13, %19 : vector<2x32xf32>
    %21 = arith.truncf %20 : vector<2x32xf32> to vector<2x32xbf16>
    %c0_10 = arith.constant 0 : index
    %c0_11 = arith.constant 0 : index
    %22 = vector.load %arg4[%c0_10, %c0_11] : memref<32x8xbf16, #tpu.memory_space<vmem>>, vector<32x8xbf16>
    %cst_12 = arith.constant dense<0.000000e+00> : vector<2x8xf32>
    %23 = tpu.matmul %21, %22, %cst_12 {dimension_numbers = #tpu.dot_dimension_numbers<[1], [0], [0], [1], [0, 0, 1, 1], [], []>} : vector<2x32xbf16>, vector<32x8xbf16>, vector<2x8xf32> -> vector<2x8xf32>
    %c0_13 = arith.constant 0 : index
    %c0_14 = arith.constant 0 : index
    %24 = vector.load %arg5[%c0_13, %c0_14] : memref<1x8xf32, #tpu.memory_space<vmem>>, vector<1x8xf32>
    %25 = vector.broadcast %24 : vector<1x8xf32> to vector<2x8xf32>
    %26 = arith.addf %23, %25 : vector<2x8xf32>
    %27 = tpu.iota {dimensions = array<i32: 1>} : vector<2x8xi32>
    %cst_15 = arith.constant dense<0xFF800000> : vector<2xf32>
    %28 = vector.multi_reduction <maximumf>, %26, %cst_15 [1] : vector<2x8xf32> to vector<2xf32>
    %29 = vector.shape_cast %28 : vector<2xf32> to vector<2x1xf32>
    %30 = vector.broadcast %29 : vector<2x1xf32> to vector<2x8xf32>
    %31 = arith.cmpf oeq, %26, %30 : vector<2x8xf32>
    %c8_i32 = arith.constant 8 : i32
    %32 = vector.broadcast %c8_i32 : i32 to vector<2x8xi32>
    %33 = arith.select %31, %27, %32 : vector<2x8xi1>, vector<2x8xi32>
    %cst_16 = arith.constant dense<2147483647> : vector<2xi32>
    %34 = vector.multi_reduction <minsi>, %33, %cst_16 [1] : vector<2x8xi32> to vector<2xi32>
    %35 = vector.shape_cast %34 : vector<2xi32> to vector<2x1xi32>
    %c0_17 = arith.constant 0 : index
    %c0_18 = arith.constant 0 : index
    %36 = vector.load %arg11[%c0_17, %c0_18] : memref<2x8xf32, #tpu.memory_space<vmem>>, vector<2x8xf32>
    tpu.vector_store %arg11[%c0_17, %c0_18], %26 {strides = array<i32>} : memref<2x8xf32, #tpu.memory_space<vmem>>, vector<2x8xf32>,
    %c0_19 = arith.constant 0 : index
    %c0_20 = arith.constant 0 : index
    %37 = vector.load %arg10[%c0_19, %c0_20] : memref<2x1xi32, #tpu.memory_space<vmem>>, vector<2x1xi32>
    tpu.vector_store %arg10[%c0_19, %c0_20], %35 {strides = array<i32>} : memref<2x1xi32, #tpu.memory_space<vmem>>, vector<2x1xi32>,
    %38 = vector.extract_strided_slice %35 {offsets = [0, 0], sizes = [1, 1], strides = [1, 1]} : vector<2x1xi32> to vector<1x1xi32>
    %39 = vector.shape_cast %38 : vector<1x1xi32> to vector<1x1x1xi32>
    %40 = tpu.iota {dimensions = array<i32: 0>} : vector<8x1x1xi32>
    %41 = vector.broadcast %39 : vector<1x1x1xi32> to vector<8x1x1xi32>
    %42 = arith.cmpi eq, %40, %41 : vector<8x1x1xi32>
    %c0_21 = arith.constant 0 : index
    %c0_22 = arith.constant 0 : index
    %c0_23 = arith.constant 0 : index
    %43 = vector.load %arg8[%c0_21, %c0_22, %c0_23] : memref<8x32x128xbf16, #tpu.memory_space<vmem>>, vector<8x32x128xbf16>
    %44 = arith.extui %42 : vector<8x1x1xi1> to vector<8x1x1xi32>
    %45 = arith.sitofp %44 : vector<8x1x1xi32> to vector<8x1x1xf32>
    %46 = arith.truncf %45 : vector<8x1x1xf32> to vector<8x1x1xbf16>
    %47 = vector.broadcast %46 : vector<8x1x1xbf16> to vector<8x32x128xbf16>
    %48 = arith.mulf %43, %47 : vector<8x32x128xbf16>
    %49 = arith.extf %48 : vector<8x32x128xbf16> to vector<8x32x128xf32>
    %cst_24 = arith.constant dense<0.000000e+00> : vector<32x128xf32>
    %50 = vector.multi_reduction <add>, %49, %cst_24 [0] : vector<8x32x128xf32> to vector<32x128xf32>
    %51 = arith.truncf %50 : vector<32x128xf32> to vector<32x128xbf16>
    %52 = arith.truncf %11 : vector<16x32xf32> to vector<16x32xbf16>
    %c0_25 = arith.constant 0 : index
    %c0_26 = arith.constant 0 : index
    %53 = vector.load %arg6[%c0_25, %c0_26] : memref<32x32xbf16, #tpu.memory_space<vmem>>, vector<32x32xbf16>
    %cst_27 = arith.constant dense<0.000000e+00> : vector<16x32xf32>
    %54 = tpu.matmul %52, %53, %cst_27 {dimension_numbers = #tpu.dot_dimension_numbers<[1], [0], [0], [1], [0, 0, 1, 1], [], []>} : vector<16x32xbf16>, vector<32x32xbf16>, vector<16x32xf32> -> vector<16x32xf32>
    %c0_28 = arith.constant 0 : index
    %c0_29 = arith.constant 0 : index
    %55 = vector.load %arg7[%c0_28, %c0_29] : memref<1x32xf32, #tpu.memory_space<vmem>>, vector<1x32xf32>
    %56 = vector.broadcast %55 : vector<1x32xf32> to vector<16x32xf32>
    %57 = arith.addf %54, %56 : vector<16x32xf32>
    %cst_30 = arith.constant 0.000000e+00 : f32
    %58 = vector.broadcast %cst_30 : f32 to vector<16x32xf32>
    %59 = arith.maximumf %57, %58 : vector<16x32xf32>
    %60 = arith.truncf %59 : vector<16x32xf32> to vector<16x32xbf16>
    %cst_31 = arith.constant dense<0.000000e+00> : vector<16x128xf32>
    %61 = tpu.matmul %60, %51, %cst_31 {dimension_numbers = #tpu.dot_dimension_numbers<[1], [0], [0], [1], [0, 0, 1, 1], [], []>} : vector<16x32xbf16>, vector<32x128xbf16>, vector<16x128xf32> -> vector<16x128xf32>
    %62 = vector.shape_cast %61 : vector<16x128xf32> to vector<2x8x128xf32>
    %63 = tpu.iota {dimensions = array<i32: 2>} : vector<2x8x128xi32>
    %cst_32 = arith.constant dense<0xFF800000> : vector<2x8xf32>
    %64 = vector.multi_reduction <maximumf>, %62, %cst_32 [2] : vector<2x8x128xf32> to vector<2x8xf32>
    %65 = vector.shape_cast %64 : vector<2x8xf32> to vector<2x8x1xf32>
    %66 = vector.broadcast %65 : vector<2x8x1xf32> to vector<2x8x128xf32>
    %67 = arith.cmpf oeq, %62, %66 : vector<2x8x128xf32>
    %c128_i32 = arith.constant 128 : i32
    %68 = vector.broadcast %c128_i32 : i32 to vector<2x8x128xi32>
    %69 = arith.select %67, %63, %68 : vector<2x8x128xi1>, vector<2x8x128xi32>
    %cst_33 = arith.constant dense<2147483647> : vector<2x8xi32>
    %70 = vector.multi_reduction <minsi>, %69, %cst_33 [2] : vector<2x8x128xi32> to vector<2x8xi32>
    %c0_34 = arith.constant 0 : index
    %c0_35 = arith.constant 0 : index
    %71 = vector.load %arg9[%c0_34, %c0_35] : memref<2x8xi32, #tpu.memory_space<vmem>>, vector<2x8xi32>
    tpu.vector_store %arg9[%c0_34, %c0_35], %70 {strides = array<i32>} : memref<2x8xi32, #tpu.memory_space<vmem>>, vector<2x8xi32>,
    return
  }
}

</mosaic_0001>

<llo_original>
// kernel: tpu_custom_call.1
$region0: #{tpu_custom_call.1}
  #allocation0 [shape = 'u32[]', space=smem, size = 0x4, offset = 0x4, fixed_abs, tag = 'smem constant byte address 0x4 - core index']
  #allocation1 [shape = 'u32[144,128]{1,0:T(1,128)}', space=vmem, size = 0x12000, scoped, tag = 'internal scratch']
  %s0 = inlined_call_operand.vmem [shape: s32[16,1], index: 0, kind: input, shape index: {}]
  %s1 = inlined_call_operand.vmem [shape: f32[16,1], index: 1, kind: input, shape index: {}]
  %s2 = inlined_call_operand.vmem [shape: f32[2,8], index: 2, kind: input, shape index: {}]
  %s3 = inlined_call_operand.vmem [shape: bf16[128,32], index: 3, kind: input, shape index: {}]
  %s4 = inlined_call_operand.vmem [shape: bf16[32,8], index: 4, kind: input, shape index: {}]
  %s5 = inlined_call_operand.vmem [shape: f32[1,8], index: 5, kind: input, shape index: {}]
  %s6 = inlined_call_operand.vmem [shape: bf16[32,32], index: 6, kind: input, shape index: {}]
  %s7 = inlined_call_operand.vmem [shape: f32[1,32], index: 7, kind: input, shape index: {}]
  %s8 = inlined_call_operand.vmem [shape: bf16[8,32,128], index: 8, kind: input, shape index: {}]
  %s9 = inlined_call_operand.hbm [shape: s32[2,8], index: 9, kind: output, shape index: {0}]
  %s10 = inlined_call_operand.vmem [shape: s32[2,1], index: 10, kind: output, shape index: {1}]
  %s11 = inlined_call_operand.hbm [shape: f32[2,8], index: 11, kind: output, shape index: {2}]
  %12 = xla_tuple %s9, %s10, %s11
  %s13 = sld [smem:[#allocation0]]
  $region62: #{tpu_custom_call.1} parent=0
    _
  %s15 = ssub.s32 1, %s13
  %s16 = scalar_select 0, %s15, %s13
  $region1: #{tpu_custom_call.1} parent=0
    #allocation2 [shape = 'u8[1024]{0}', space=vmem, size = 0x400, scoped, tag = 'output window, operand 0, single buffered']
    #allocation3 [shape = 's32[1]{0}', space=sflag, size = 0x4, scoped, tag = 'scoped memory for tpu_custom_call.1']
    #allocation4 [shape = 'u8[1024]{0}', space=vmem, size = 0x400, scoped, tag = 'output window, operand 2, single buffered']
    #allocation5 [shape = 's32[1]{0}', space=sflag, size = 0x4, scoped, tag = 'scoped memory for tpu_custom_call.1']
    %17 = vsyncpa [#allocation3], 0
    %18 = vsyncpa [#allocation5], 0
    // Predicated region
    $region2: #{tpu_custom_call.1} parent=1 // pred_check
      _
    $region3: #{tpu_custom_call.1} parent=1 // pred_check_branch
      %20 = sbr.rel (0) target = $region5
    $region4: #{tpu_custom_call.1} parent=1 // pred_region
      _
    $region5: #{tpu_custom_call.1} parent=1 // pred_fallthru
      _
    // Predicated region
    $region6: #{tpu_custom_call.1} parent=1 // pred_check
      _
    $region7: #{tpu_custom_call.1} parent=1 // pred_check_branch
      %22 = sbr.rel (0) target = $region9
    $region8: #{tpu_custom_call.1} parent=1 // pred_region
      _
    $region9: #{tpu_custom_call.1} parent=1 // pred_fallthru
      _
    // Predicated region
    $region10: #{tpu_custom_call.1} parent=1 // pred_check
      _
    $region11: #{tpu_custom_call.1} parent=1 // pred_check_branch
      %24 = sbr.rel (0) target = $region13
    $region12: #{tpu_custom_call.1} parent=1 // pred_region
      _
    $region13: #{tpu_custom_call.1} parent=1 // pred_fallthru
      _
    // Predicated region
    $region14: #{tpu_custom_call.1} parent=1 // pred_check
      _
    $region15: #{tpu_custom_call.1} parent=1 // pred_check_branch
      %26 = sbr.rel (0) target = $region17
    $region16: #{tpu_custom_call.1} parent=1 // pred_region
      _
    $region17: #{tpu_custom_call.1} parent=1 // pred_fallthru
      _
    // Predicated region
    $region18: #{tpu_custom_call.1} parent=1 // pred_check
      _
    $region19: #{tpu_custom_call.1} parent=1 // pred_check_branch
      %28 = sbr.rel (0) target = $region21
    $region20: #{tpu_custom_call.1} parent=1 // pred_region
      _
    $region21: #{tpu_custom_call.1} parent=1 // pred_fallthru
      _
    // Predicated region
    $region22: #{tpu_custom_call.1} parent=1 // pred_check
      _
    $region23: #{tpu_custom_call.1} parent=1 // pred_check_branch
      %30 = sbr.rel (0) target = $region25
    $region24: #{tpu_custom_call.1} parent=1 // pred_region
      _
    $region25: #{tpu_custom_call.1} parent=1 // pred_fallthru
      _
    // Predicated region
    $region26: #{tpu_custom_call.1} parent=1 // pred_check
      _
    $region27: #{tpu_custom_call.1} parent=1 // pred_check_branch
      %32 = sbr.rel (0) target = $region29
    $region28: #{tpu_custom_call.1} parent=1 // pred_region
      _
    $region29: #{tpu_custom_call.1} parent=1 // pred_fallthru
      _
    // Predicated region
    $region30: #{tpu_custom_call.1} parent=1 // pred_check
      _
    $region31: #{tpu_custom_call.1} parent=1 // pred_check_branch
      %34 = sbr.rel (0) target = $region33
    $region32: #{tpu_custom_call.1} parent=1 // pred_region
      _
    $region33: #{tpu_custom_call.1} parent=1 // pred_fallthru
      _
    // Predicated region
    $region34: #{tpu_custom_call.1} parent=1 // pred_check
      _
    $region35: #{tpu_custom_call.1} parent=1 // pred_check_branch
      %36 = sbr.rel (0) target = $region37
    $region36: #{tpu_custom_call.1} parent=1 // pred_region
      _
    $region37: #{tpu_custom_call.1} parent=1 // pred_fallthru
      _
    %v38 = vlaneseq
    %v39 = vand.u32 %v38, 127
    %v40 = vld [vmem:[%s0] sm:$0xff]
    %v41 = vld [vmem:[%s0 + $0x8] sm:$0xff]
    %42 = vset.pattern.permute.xlu0 0
    %43 = vperm.xlu0 %42, %v40
    %v44 = vpop.permute.xlu0 %43
    %45 = vset.pattern.permute.xlu0 0
    %46 = vperm.xlu0 %45, %v41
    %v47 = vpop.permute.xlu0 %46
    %vm48 = vcmp.eq.s32.totalorder %v39, %v44
    %vm49 = vcmp.eq.s32.totalorder %v39, %v47
    %v50 = vsel %vm48, 1, 0
    %v51 = vsel %vm49, 1, 0
    %v52 = vcvt.s32.f32 %v50
    %v53 = vcvt.s32.f32 %v51
    %v54 = vpack.c.bf16 %v53, %v52
    %v55 = vld [vmem:[%s3] sm:$0xf]
    %v56 = vld [vmem:[%s3 + $0x4] sm:$0xf]
    %v57 = vld [vmem:[%s3 + $0x8] sm:$0xf]
    %v58 = vld [vmem:[%s3 + $0xc] sm:$0xf]
    %v59 = vld [vmem:[%s3 + $0x10] sm:$0xf]
    %v60 = vld [vmem:[%s3 + $0x14] sm:$0xf]
    %v61 = vld [vmem:[%s3 + $0x18] sm:$0xf]
    %v62 = vld [vmem:[%s3 + $0x1c] sm:$0xf]
    %v63 = vld [vmem:[%s3 + $0x20] sm:$0xf]
    %v64 = vld [vmem:[%s3 + $0x24] sm:$0xf]
    %v65 = vld [vmem:[%s3 + $0x28] sm:$0xf]
    %v66 = vld [vmem:[%s3 + $0x2c] sm:$0xf]
    %v67 = vld [vmem:[%s3 + $0x30] sm:$0xf]
    %v68 = vld [vmem:[%s3 + $0x34] sm:$0xf]
    %v69 = vld [vmem:[%s3 + $0x38] sm:$0xf]
    %v70 = vld [vmem:[%s3 + $0x3c] sm:$0xf]
    %v87 = vunpack.c.l.b16 %v55
    %v88 = vunpack.c.l.b16 %v56
    %v89 = vunpack.c.l.b16 %v57
    %v90 = vunpack.c.l.b16 %v58
    %v91 = vunpack.c.l.b16 %v59
    %v92 = vunpack.c.l.b16 %v60
    %v93 = vunpack.c.l.b16 %v61
    %v94 = vunpack.c.l.b16 %v62
    %v95 = vunpack.c.l.b16 %v63
    %v96 = vunpack.c.l.b16 %v64
    %v97 = vunpack.c.l.b16 %v65
    %v98 = vunpack.c.l.b16 %v66
    %v99 = vunpack.c.l.b16 %v67
    %v100 = vunpack.c.l.b16 %v68
    %v101 = vunpack.c.l.b16 %v69
    %v102 = vunpack.c.l.b16 %v70
    %v103 = vpack.c.b16 %v88, %v87
    %v104 = vpack.c.b16 %v90, %v89
    %v105 = vpack.c.b16 %v92, %v91
    %v106 = vpack.c.b16 %v94, %v93
    %v107 = vpack.c.b16 %v96, %v95
    %v108 = vpack.c.b16 %v98, %v97
    %v109 = vpack.c.b16 %v100, %v99
    %v110 = vpack.c.b16 %v102, %v101
    %119 = vmatprep.subr.bf16.mxu0 0
    %120 = vmatpush1.bf16.msra.mxu0 %v103
    %121 = vmatprep.subr.bf16.mxu0 0
    %122 = vmatpush1.bf16.msra.mxu0 %v104
    %123 = vmatprep.subr.bf16.mxu0 0
    %124 = vmatpush1.bf16.msra.mxu0 %v105
    %125 = vmatprep.subr.bf16.mxu0 0
    %126 = vmatpush1.bf16.msra.mxu0 %v106
    %127 = vmatprep.subr.bf16.mxu0 0
    %128 = vmatpush1.bf16.msra.mxu0 %v107
    %129 = vmatprep.subr.bf16.mxu0 0
    %130 = vmatpush1.bf16.msra.mxu0 %v108
    %131 = vmatprep.subr.bf16.mxu0 0
    %132 = vmatpush1.bf16.msra.mxu0 %v109
    %133 = vmatprep.subr.bf16.mxu0 0
    %134 = vmatpush1.bf16.msra.mxu0 %v110
    %135 = vmatprep.subr.bf16.mxu0 0
    %136 = vmatpush1.bf16.msra.mxu0 0
    %137 = vmatprep.subr.bf16.mxu0 0
    %138 = vmatpush1.bf16.msra.mxu0 0
    %139 = vmatprep.subr.bf16.mxu0 0
    %140 = vmatpush1.bf16.msra.mxu0 0
    %141 = vmatprep.subr.bf16.mxu0 0
    %142 = vmatpush1.bf16.msra.mxu0 0
    %143 = vmatprep.subr.bf16.mxu0 0
    %144 = vmatpush1.bf16.msra.mxu0 0
    %145 = vmatprep.subr.bf16.mxu0 0
    %146 = vmatpush1.bf16.msra.mxu0 0
    %147 = vmatprep.subr.bf16.mxu0 0
    %148 = vmatpush1.bf16.msra.mxu0 0
    %149 = vmatprep.subr.bf16.mxu0 0
    %150 = vmatpush1.bf16.msra.mxu0 0
    %151 = vmatprep.mubr.bf16.mxu0 0
    %152 = vmatmul.mubr.bf16.gmra.mrb[0].mxu0 %v54
    %v153 = vpop.f32.mrb[0].mxu0
    %v154 = vadd.f32 0.0, %v153
    %v155 = vpop.f32.mrb[0].mxu0
    %v156 = vpop.f32.mrb[0].mxu0
    %v157 = vadd.f32 0.0, %v156
    %v158 = vpop.f32.mrb[0].mxu0
    %159 = vdwg.mxu0
    %v160 = vld [vmem:[%s1] sm:$0xff]
    %v161 = vld [vmem:[%s1 + $0x8] sm:$0xff]
    %163 = vset.pattern.permute.xlu0 0
    %164 = vperm.xlu0 %163, %v160
    %v165 = vpop.permute.xlu0 %164
    %168 = vset.pattern.permute.xlu0 0
    %169 = vperm.xlu0 %168, %v161
    %v170 = vpop.permute.xlu0 %169
    %v172 = vmul.f32 %v154, %v165
    %v173 = vmul.f32 %v157, %v170
    %vm174 = vcmask 261120
    %v175 = vsel %vm174, %v172, 0.0
    %v176 = vrot.slane %v175, 4
    %v177 = vadd.f32 %v175, %v176
    %v178 = vrot.slane %v177, 2
    %v179 = vadd.f32 %v177, %v178
    %v180 = vrot.slane %v179, 1
    %v181 = vadd.f32 %v179, %v180
    %v182 = vsel %vm174, %v173, 0.0
    %v183 = vrot.slane %v182, 4
    %v184 = vadd.f32 %v182, %v183
    %v185 = vrot.slane %v184, 2
    %v186 = vadd.f32 %v184, %v185
    %v187 = vrot.slane %v186, 1
    %v188 = vadd.f32 %v186, %v187
    %v189 = vld [vmem:[%s2] sm:$0x3]
    %vm190 = vcmask 58368
    %v191 = vsel %vm190, %v189, 0.0
    %192 = vadd.xlane.f32.xlu0 %v191
    %v193 = vpop.xlane.xlu0 %192
    %v194 = vmax.f32 %v193, 1.0
    %v196 = vrot.slane %v194, 1
    %v199 = vrcp.pop %v194
    %v200 = vmul.f32 %v181, %v199
    %v201 = vrcp.pop %v196
    %v202 = vmul.f32 %v188, %v201
    %v203 = vpack.c.bf16 %v200, %v200
    %v204 = vpack.c.bf16 %v202, %v202
    %v205 = vld [vmem:[%s4] sm:$0xf]
    %v206 = vld [vmem:[%s4 + $0x4] sm:$0xf]
    %v207 = vld [vmem:[%s4 + $0x8] sm:$0xf]
    %v208 = vld [vmem:[%s4 + $0xc] sm:$0xf]
    %v209 = vld [vmem:[%s5] sm:$0x1]
    %v211 = vlaneseq
    %v212 = vshrl.u32 %v211, 7
    %v213 = vsub.s32 0, %v212
    %v214 = vrot.slane %v209, %v213
    %v218 = vunpack.c.l.b16 %v203
    %v219 = vunpack.c.l.b16 %v204
    %v220 = vrot.slane %v219, 7
    %vm221 = vcmask 1041409
    %v222 = vsel %vm221, %v220, %v218
    %v223 = vpack.c.b16 %v222, %v222
    %v228 = vunpack.c.l.b16 %v205
    %v229 = vunpack.c.l.b16 %v206
    %v230 = vunpack.c.l.b16 %v207
    %v231 = vunpack.c.l.b16 %v208
    %v232 = vpack.c.b16 %v229, %v228
    %v233 = vpack.c.b16 %v231, %v230
    %v237 = vsel %vm174, %v223, 0
    %239 = vmatprep.subr.bf16.mxu0 0
    %240 = vmatpush1.bf16.msra.mxu0 %v232
    %241 = vmatprep.subr.bf16.mxu0 0
    %242 = vmatpush1.bf16.msra.mxu0 %v233
    %243 = vmatprep.subr.bf16.mxu0 0
    %244 = vmatpush1.bf16.msra.mxu0 0
    %245 = vmatprep.subr.bf16.mxu0 0
    %246 = vmatpush1.bf16.msra.mxu0 0
    %247 = vmatprep.subr.bf16.mxu0 0
    %248 = vmatpush1.bf16.msra.mxu0 0
    %249 = vmatprep.subr.bf16.mxu0 0
    %250 = vmatpush1.bf16.msra.mxu0 0
    %251 = vmatprep.subr.bf16.mxu0 0
    %252 = vmatpush1.bf16.msra.mxu0 0
    %253 = vmatprep.subr.bf16.mxu0 0
    %254 = vmatpush1.bf16.msra.mxu0 0
    %255 = vmatprep.subr.bf16.mxu0 0
    %256 = vmatpush1.bf16.msra.mxu0 0
    %257 = vmatprep.subr.bf16.mxu0 0
    %258 = vmatpush1.bf16.msra.mxu0 0
    %259 = vmatprep.subr.bf16.mxu0 0
    %260 = vmatpush1.bf16.msra.mxu0 0
    %261 = vmatprep.subr.bf16.mxu0 0
    %262 = vmatpush1.bf16.msra.mxu0 0
    %263 = vmatprep.subr.bf16.mxu0 0
    %264 = vmatpush1.bf16.msra.mxu0 0
    %265 = vmatprep.subr.bf16.mxu0 0
    %266 = vmatpush1.bf16.msra.mxu0 0
    %267 = vmatprep.subr.bf16.mxu0 0
    %268 = vmatpush1.bf16.msra.mxu0 0
    %269 = vmatprep.subr.bf16.mxu0 0
    %270 = vmatpush1.bf16.msra.mxu0 0
    %271 = vmatprep.mubr.bf16.mxu0 0
    %272 = vmatmul.mubr.bf16.gmra.mrb[0].mxu0 %v237
    %v273 = vpop.f32.mrb[0].mxu0
    %v274 = vadd.f32 %v214, %v273
    %v275 = vpop.f32.mrb[0].mxu0
    %v276 = vpop.f32.mrb[0].mxu0
    %v277 = vpop.f32.mrb[0].mxu0
    %278 = vdwg.mxu0
    %v279 = vsel %vm190, %v274, -inf
    %280 = vmax.xlane.f32.xlu0 %v279
    %v281 = vpop.xlane.xlu0 %280
    %vm282 = vcmp.eq.f32.partialorder %v274, %v281
    %v283 = vsel %vm282, %v39, 8
    %v284 = vsel %vm190, %v283, 2147483647
    %v285 = vand.u32 %v284, 65535
    %v286 = vshra.s32 %v284, 16
    %v287 = vcvt.s32.f32 %v285
    %v288 = vcvt.s32.f32 %v286
    %289 = vmin.xlane.f32.xlu0 %v288
    %v290 = vpop.xlane.xlu0 %289
    %vm291 = vcmp.eq.f32.partialorder %v288, %v290
    %v292 = vsel %vm291, %v287, inf
    %293 = vmin.xlane.f32.xlu0 %v292
    %v294 = vpop.xlane.xlu0 %293
    %v295 = vcvt.f32.s32 %v294
    %v296 = vcvt.f32.s32 %v290
    %v297 = vshll.u32 %v296, 16
    %v298 = vadd.s32 %v297, %v295
    %299 = vst.msk [vmem:[#allocation4] sm:$0x3] %vm190, %v274
    %vm300 = vcmask 1024
    %301 = vst.msk [vmem:[%s10] sm:$0x3] %vm300, %v298
    %vm302 = vcmp.eq.s32.totalorder %v298, 0
    %vm303 = vcmp.eq.s32.totalorder %v298, 1
    %vm304 = vcmp.eq.s32.totalorder %v298, 2
    %vm305 = vcmp.eq.s32.totalorder %v298, 3
    %vm306 = vcmp.eq.s32.totalorder %v298, 4
    %vm307 = vcmp.eq.s32.totalorder %v298, 5
    %vm308 = vcmp.eq.s32.totalorder %v298, 6
    %vm309 = vcmp.eq.s32.totalorder %v298, 7
    %v310 = vld [vmem:[%s8] sm:$0xf]
    %v311 = vld [vmem:[%s8 + $0x4] sm:$0xf]
    %v312 = vld [vmem:[%s8 + $0x8] sm:$0xf]
    %v313 = vld [vmem:[%s8 + $0xc] sm:$0xf]
    %v314 = vld [vmem:[%s8 + $0x10] sm:$0xf]
    %v315 = vld [vmem:[%s8 + $0x14] sm:$0xf]
    %v316 = vld [vmem:[%s8 + $0x18] sm:$0xf]
    %v317 = vld [vmem:[%s8 + $0x1c] sm:$0xf]
    %v318 = vld [vmem:[%s8 + $0x20] sm:$0xf]
    %v319 = vld [vmem:[%s8 + $0x24] sm:$0xf]
    %v320 = vld [vmem:[%s8 + $0x28] sm:$0xf]
    %v321 = vld [vmem:[%s8 + $0x2c] sm:$0xf]
    %v322 = vld [vmem:[%s8 + $0x30] sm:$0xf]
    %v323 = vld [vmem:[%s8 + $0x34] sm:$0xf]
    %v324 = vld [vmem:[%s8 + $0x38] sm:$0xf]
    %v325 = vld [vmem:[%s8 + $0x3c] sm:$0xf]
    %v326 = vld [vmem:[%s8 + $0x40] sm:$0xf]
    %v327 = vld [vmem:[%s8 + $0x44] sm:$0xf]
    %v328 = vld [vmem:[%s8 + $0x48] sm:$0xf]
    %v329 = vld [vmem:[%s8 + $0x4c] sm:$0xf]
    %v330 = vld [vmem:[%s8 + $0x50] sm:$0xf]
    %v331 = vld [vmem:[%s8 + $0x54] sm:$0xf]
    %v332 = vld [vmem:[%s8 + $0x58] sm:$0xf]
    %v333 = vld [vmem:[%s8 + $0x5c] sm:$0xf]
    %v334 = vld [vmem:[%s8 + $0x60] sm:$0xf]
    %v335 = vld [vmem:[%s8 + $0x64] sm:$0xf]
    %v336 = vld [vmem:[%s8 + $0x68] sm:$0xf]
    %v337 = vld [vmem:[%s8 + $0x6c] sm:$0xf]
    %v338 = vld [vmem:[%s8 + $0x70] sm:$0xf]
    %v339 = vld [vmem:[%s8 + $0x74] sm:$0xf]
    %v340 = vld [vmem:[%s8 + $0x78] sm:$0xf]
    %v341 = vld [vmem:[%s8 + $0x7c] sm:$0xf]
    %v342 = vsel %vm302, 1, 0
    %v343 = vsel %vm303, 1, 0
    %v344 = vsel %vm304, 1, 0
    %v345 = vsel %vm305, 1, 0
    %v346 = vsel %vm306, 1, 0
    %v347 = vsel %vm307, 1, 0
    %v348 = vsel %vm308, 1, 0
    %v349 = vsel %vm309, 1, 0
    %v350 = vcvt.s32.f32 %v342
    %v351 = vcvt.s32.f32 %v343
    %v352 = vcvt.s32.f32 %v344
    %v353 = vcvt.s32.f32 %v345
    %v354 = vcvt.s32.f32 %v346
    %v355 = vcvt.s32.f32 %v347
    %v356 = vcvt.s32.f32 %v348
    %v357 = vcvt.s32.f32 %v349
    %v358 = vpack.c.bf16 %v350, %v350
    %v359 = vpack.c.bf16 %v351, %v351
    %v360 = vpack.c.bf16 %v352, %v352
    %v361 = vpack.c.bf16 %v353, %v353
    %v362 = vpack.c.bf16 %v354, %v354
    %v363 = vpack.c.bf16 %v355, %v355
    %v364 = vpack.c.bf16 %v356, %v356
    %v365 = vpack.c.bf16 %v357, %v357
    %v367 = vpack.i.b16 %v358, %v358
    %v369 = vlaneseq
    %v370 = vshrl.u32 %v369, 7
    %v371 = vsub.s32 0, %v370
    %v372 = vrot.slane %v367, %v371
    %v374 = vpack.i.b16 %v359, %v359
    %v376 = vlaneseq
    %v377 = vshrl.u32 %v376, 7
    %v378 = vsub.s32 0, %v377
    %v379 = vrot.slane %v374, %v378
    %v381 = vpack.i.b16 %v360, %v360
    %v383 = vlaneseq
    %v384 = vshrl.u32 %v383, 7
    %v385 = vsub.s32 0, %v384
    %v386 = vrot.slane %v381, %v385
    %v388 = vpack.i.b16 %v361, %v361
    %v390 = vlaneseq
    %v391 = vshrl.u32 %v390, 7
    %v392 = vsub.s32 0, %v391
    %v393 = vrot.slane %v388, %v392
    %v395 = vpack.i.b16 %v362, %v362
    %v397 = vlaneseq
    %v398 = vshrl.u32 %v397, 7
    %v399 = vsub.s32 0, %v398
    %v400 = vrot.slane %v395, %v399
    %v402 = vpack.i.b16 %v363, %v363
    %v404 = vlaneseq
    %v405 = vshrl.u32 %v404, 7
    %v406 = vsub.s32 0, %v405
    %v407 = vrot.slane %v402, %v406
    %v409 = vpack.i.b16 %v364, %v364
    %v411 = vlaneseq
    %v412 = vshrl.u32 %v411, 7
    %v413 = vsub.s32 0, %v412
    %v414 = vrot.slane %v409, %v413
    %v416 = vpack.i.b16 %v365, %v365
    %v418 = vlaneseq
    %v419 = vshrl.u32 %v418, 7
    %v420 = vsub.s32 0, %v419
    %v421 = vrot.slane %v416, %v420
    %v422 = vmul.bf16 %v310, %v372
    %v423 = vmul.bf16 %v311, %v372
    %v424 = vmul.bf16 %v312, %v372
    %v425 = vmul.bf16 %v313, %v372
    %v426 = vmul.bf16 %v314, %v379
    %v427 = vmul.bf16 %v315, %v379
    %v428 = vmul.bf16 %v316, %v379
    %v429 = vmul.bf16 %v317, %v379
    %v430 = vmul.bf16 %v318, %v386
    %v431 = vmul.bf16 %v319, %v386
    %v432 = vmul.bf16 %v320, %v386
    %v433 = vmul.bf16 %v321, %v386
    %v434 = vmul.bf16 %v322, %v393
    %v435 = vmul.bf16 %v323, %v393
    %v436 = vmul.bf16 %v324, %v393
    %v437 = vmul.bf16 %v325, %v393
    %v438 = vmul.bf16 %v326, %v400
    %v439 = vmul.bf16 %v327, %v400
    %v440 = vmul.bf16 %v328, %v400
    %v441 = vmul.bf16 %v329, %v400
    %v442 = vmul.bf16 %v330, %v407
    %v443 = vmul.bf16 %v331, %v407
    %v444 = vmul.bf16 %v332, %v407
    %v445 = vmul.bf16 %v333, %v407
    %v446 = vmul.bf16 %v334, %v414
    %v447 = vmul.bf16 %v335, %v414
    %v448 = vmul.bf16 %v336, %v414
    %v449 = vmul.bf16 %v337, %v414
    %v450 = vmul.bf16 %v338, %v421
    %v451 = vmul.bf16 %v339, %v421
    %v452 = vmul.bf16 %v340, %v421
    %v453 = vmul.bf16 %v341, %v421
    %v454 = vunpack.c.l.bf16 %v422
    %v455 = vunpack.c.l.bf16 %v423
    %v456 = vunpack.c.l.bf16 %v424
    %v457 = vunpack.c.l.bf16 %v425
    %v458 = vunpack.c.l.bf16 %v426
    %v459 = vunpack.c.l.bf16 %v427
    %v460 = vunpack.c.l.bf16 %v428
    %v461 = vunpack.c.l.bf16 %v429
    %v462 = vunpack.c.l.bf16 %v430
    %v463 = vunpack.c.l.bf16 %v431
    %v464 = vunpack.c.l.bf16 %v432
    %v465 = vunpack.c.l.bf16 %v433
    %v466 = vunpack.c.l.bf16 %v434
    %v467 = vunpack.c.l.bf16 %v435
    %v468 = vunpack.c.l.bf16 %v436
    %v469 = vunpack.c.l.bf16 %v437
    %v470 = vunpack.c.l.bf16 %v438
    %v471 = vunpack.c.l.bf16 %v439
    %v472 = vunpack.c.l.bf16 %v440
    %v473 = vunpack.c.l.bf16 %v441
    %v474 = vunpack.c.l.bf16 %v442
    %v475 = vunpack.c.l.bf16 %v443
    %v476 = vunpack.c.l.bf16 %v444
    %v477 = vunpack.c.l.bf16 %v445
    %v478 = vunpack.c.l.bf16 %v446
    %v479 = vunpack.c.l.bf16 %v447
    %v480 = vunpack.c.l.bf16 %v448
    %v481 = vunpack.c.l.bf16 %v449
    %v482 = vunpack.c.l.bf16 %v450
    %v483 = vunpack.c.l.bf16 %v451
    %v484 = vunpack.c.l.bf16 %v452
    %v485 = vunpack.c.l.bf16 %v453
    %v486 = vadd.f32 %v454, %v458
    %v487 = vadd.f32 %v486, %v462
    %v488 = vadd.f32 %v487, %v466
    %v489 = vadd.f32 %v488, %v470
    %v490 = vadd.f32 %v489, %v474
    %v491 = vadd.f32 %v490, %v478
    %v492 = vadd.f32 %v491, %v482
    %v493 = vadd.f32 %v455, %v459
    %v494 = vadd.f32 %v493, %v463
    %v495 = vadd.f32 %v494, %v467
    %v496 = vadd.f32 %v495, %v471
    %v497 = vadd.f32 %v496, %v475
    %v498 = vadd.f32 %v497, %v479
    %v499 = vadd.f32 %v498, %v483
    %v500 = vadd.f32 %v456, %v460
    %v501 = vadd.f32 %v500, %v464
    %v502 = vadd.f32 %v501, %v468
    %v503 = vadd.f32 %v502, %v472
    %v504 = vadd.f32 %v503, %v476
    %v505 = vadd.f32 %v504, %v480
    %v506 = vadd.f32 %v505, %v484
    %v507 = vadd.f32 %v457, %v461
    %v508 = vadd.f32 %v507, %v465
    %v509 = vadd.f32 %v508, %v469
    %v510 = vadd.f32 %v509, %v473
    %v511 = vadd.f32 %v510, %v477
    %v512 = vadd.f32 %v511, %v481
    %v513 = vadd.f32 %v512, %v485
    %v514 = vpack.c.bf16 %v499, %v492
    %v515 = vpack.c.bf16 %v513, %v506
    %v516 = vpack.c.bf16 %v173, %v172
    %v517 = vld [vmem:[%s6] sm:$0xf]
    %v518 = vld [vmem:[%s6 + $0x4] sm:$0xf]
    %v519 = vld [vmem:[%s6 + $0x8] sm:$0xf]
    %v520 = vld [vmem:[%s6 + $0xc] sm:$0xf]
    %v521 = vld [vmem:[%s7] sm:$0x1]
    %v523 = vlaneseq
    %v524 = vshrl.u32 %v523, 7
    %v525 = vsub.s32 0, %v524
    %v526 = vrot.slane %v521, %v525
    %v532 = vunpack.c.l.b16 %v517
    %v533 = vunpack.c.l.b16 %v518
    %v534 = vunpack.c.l.b16 %v519
    %v535 = vunpack.c.l.b16 %v520
    %v536 = vpack.c.b16 %v533, %v532
    %v537 = vpack.c.b16 %v535, %v534
    %v541 = vsel %vm174, %v516, 0
    %543 = vmatprep.subr.bf16.mxu0 0
    %544 = vmatpush1.bf16.msra.mxu0 %v536
    %545 = vmatprep.subr.bf16.mxu0 0
    %546 = vmatpush1.bf16.msra.mxu0 %v537
    %547 = vmatprep.subr.bf16.mxu0 0
    %548 = vmatpush1.bf16.msra.mxu0 0
    %549 = vmatprep.subr.bf16.mxu0 0
    %550 = vmatpush1.bf16.msra.mxu0 0
    %551 = vmatprep.subr.bf16.mxu0 0
    %552 = vmatpush1.bf16.msra.mxu0 0
    %553 = vmatprep.subr.bf16.mxu0 0
    %554 = vmatpush1.bf16.msra.mxu0 0
    %555 = vmatprep.subr.bf16.mxu0 0
    %556 = vmatpush1.bf16.msra.mxu0 0
    %557 = vmatprep.subr.bf16.mxu0 0
    %558 = vmatpush1.bf16.msra.mxu0 0
    %559 = vmatprep.subr.bf16.mxu0 0
    %560 = vmatpush1.bf16.msra.mxu0 0
    %561 = vmatprep.subr.bf16.mxu0 0
    %562 = vmatpush1.bf16.msra.mxu0 0
    %563 = vmatprep.subr.bf16.mxu0 0
    %564 = vmatpush1.bf16.msra.mxu0 0
    %565 = vmatprep.subr.bf16.mxu0 0
    %566 = vmatpush1.bf16.msra.mxu0 0
    %567 = vmatprep.subr.bf16.mxu0 0
    %568 = vmatpush1.bf16.msra.mxu0 0
    %569 = vmatprep.subr.bf16.mxu0 0
    %570 = vmatpush1.bf16.msra.mxu0 0
    %571 = vmatprep.subr.bf16.mxu0 0
    %572 = vmatpush1.bf16.msra.mxu0 0
    %573 = vmatprep.subr.bf16.mxu0 0
    %574 = vmatpush1.bf16.msra.mxu0 0
    %575 = vmatprep.mubr.bf16.mxu0 0
    %576 = vmatmul.mubr.bf16.gmra.mrb[0].mxu0 %v541
    %v577 = vpop.f32.mrb[0].mxu0
    %v578 = vadd.f32 %v526, %v577
    %v579 = vpop.f32.mrb[0].mxu0
    %v580 = vpop.f32.mrb[0].mxu0
    %v581 = vadd.f32 %v526, %v580
    %v582 = vpop.f32.mrb[0].mxu0
    %583 = vdwg.mxu0
    %v584 = vmax.f32 %v578, 0.0
    %v585 = vmax.f32 %v581, 0.0
    %v586 = vpack.c.bf16 %v585, %v584
    %v588 = vsel %vm174, %v586, 0
    %590 = vmatprep.subr.bf16.mxu0 0
    %591 = vmatpush1.bf16.msra.mxu0 %v514
    %592 = vmatprep.subr.bf16.mxu0 0
    %593 = vmatpush1.bf16.msra.mxu0 %v515
    %594 = vmatprep.subr.bf16.mxu0 0
    %595 = vmatpush1.bf16.msra.mxu0 0
    %596 = vmatprep.subr.bf16.mxu0 0
    %597 = vmatpush1.bf16.msra.mxu0 0
    %598 = vmatprep.subr.bf16.mxu0 0
    %599 = vmatpush1.bf16.msra.mxu0 0
    %600 = vmatprep.subr.bf16.mxu0 0
    %601 = vmatpush1.bf16.msra.mxu0 0
    %602 = vmatprep.subr.bf16.mxu0 0
    %603 = vmatpush1.bf16.msra.mxu0 0
    %604 = vmatprep.subr.bf16.mxu0 0
    %605 = vmatpush1.bf16.msra.mxu0 0
    %606 = vmatprep.subr.bf16.mxu0 0
    %607 = vmatpush1.bf16.msra.mxu0 0
    %608 = vmatprep.subr.bf16.mxu0 0
    %609 = vmatpush1.bf16.msra.mxu0 0
    %610 = vmatprep.subr.bf16.mxu0 0
    %611 = vmatpush1.bf16.msra.mxu0 0
    %612 = vmatprep.subr.bf16.mxu0 0
    %613 = vmatpush1.bf16.msra.mxu0 0
    %614 = vmatprep.subr.bf16.mxu0 0
    %615 = vmatpush1.bf16.msra.mxu0 0
    %616 = vmatprep.subr.bf16.mxu0 0
    %617 = vmatpush1.bf16.msra.mxu0 0
    %618 = vmatprep.subr.bf16.mxu0 0
    %619 = vmatpush1.bf16.msra.mxu0 0
    %620 = vmatprep.subr.bf16.mxu0 0
    %621 = vmatpush1.bf16.msra.mxu0 0
    %622 = vmatprep.mubr.bf16.mxu0 0
    %623 = vmatmul.mubr.bf16.gmra.mrb[0].mxu0 %v588
    %v624 = vpop.f32.mrb[0].mxu0
    %v625 = vadd.f32 0.0, %v624
    %v626 = vpop.f32.mrb[0].mxu0
    %v627 = vpop.f32.mrb[0].mxu0
    %v628 = vadd.f32 0.0, %v627
    %v629 = vpop.f32.mrb[0].mxu0
    %630 = vdwg.mxu0
    %631 = vmax.xlane.f32.xlu0 %v625
    %v632 = vpop.xlane.xlu0 %631
    %633 = vmax.xlane.f32.xlu0 %v628
    %v634 = vpop.xlane.xlu0 %633
    %vm635 = vcmp.eq.f32.partialorder %v625, %v632
    %vm636 = vcmp.eq.f32.partialorder %v628, %v634
    %v637 = vsel %vm635, %v39, 128
    %v638 = vsel %vm636, %v39, 128
    %v639 = vand.u32 %v637, 65535
    %v640 = vshra.s32 %v637, 16
    %v641 = vcvt.s32.f32 %v639
    %v642 = vcvt.s32.f32 %v640
    %643 = vmin.xlane.f32.xlu0 %v642
    %v644 = vpop.xlane.xlu0 %643
    %vm645 = vcmp.eq.f32.partialorder %v642, %v644
    %v646 = vsel %vm645, %v641, inf
    %647 = vmin.xlane.f32.xlu0 %v646
    %v648 = vpop.xlane.xlu0 %647
    %v649 = vcvt.f32.s32 %v648
    %v650 = vcvt.f32.s32 %v644
    %v651 = vshll.u32 %v650, 16
    %v652 = vadd.s32 %v651, %v649
    %v653 = vand.u32 %v638, 65535
    %v654 = vshra.s32 %v638, 16
    %v655 = vcvt.s32.f32 %v653
    %v656 = vcvt.s32.f32 %v654
    %657 = vmin.xlane.f32.xlu0 %v656
    %v658 = vpop.xlane.xlu0 %657
    %vm659 = vcmp.eq.f32.partialorder %v656, %v658
    %v660 = vsel %vm659, %v655, inf
    %661 = vmin.xlane.f32.xlu0 %v660
    %v662 = vpop.xlane.xlu0 %661
    %v663 = vcvt.f32.s32 %v662
    %v664 = vcvt.f32.s32 %v658
    %v665 = vshll.u32 %v664, 16
    %v666 = vadd.s32 %v665, %v663
    %v667 = vlaneseq
    %v668 = vshrl.u32 %v667, 7
    %v669 = vsub.s32 %v39, %v668
    %v670 = vrot.slane %v652, %v669
    %v671 = vlaneseq
    %v672 = vshrl.u32 %v671, 7
    %v673 = vsub.s32 %v39, %v672
    %v674 = vrot.slane %v666, %v673
    %v675 = vsel %vm221, %v674, %v670
    %676 = vst.msk [vmem:[#allocation2] sm:$0x3] %vm190, %v675
    // Predicated region
    $region38: #{tpu_custom_call.1} parent=1 // pred_check
      _
    $region39: #{tpu_custom_call.1} parent=1 // pred_check_branch
      %678 = sbr.rel (0) target = $region41
    $region40: #{tpu_custom_call.1} parent=1 // pred_region
      %s680 = ssub.s32 32, 32
      %681 = vsyncadd [#allocation3], %s680
      %s683 = sshll.u32 [#allocation2], 4
      %s684 = int_to_ptr.vmem [resolvable:$true] %s683
      %686 = dma.vmem_to_hbm [thread:$0]  %s684, 32, %s9, [#allocation3]
    $region41: #{tpu_custom_call.1} parent=1 // pred_fallthru
      _
    // Predicated region
    $region42: #{tpu_custom_call.1} parent=1 // pred_check
      _
    $region43: #{tpu_custom_call.1} parent=1 // pred_check_branch
      %688 = sbr.rel (0) target = $region45
    $region44: #{tpu_custom_call.1} parent=1 // pred_region
      _
    $region45: #{tpu_custom_call.1} parent=1 // pred_fallthru
      _
    // Predicated region
    $region46: #{tpu_custom_call.1} parent=1 // pred_check
      _
    $region47: #{tpu_custom_call.1} parent=1 // pred_check_branch
      %690 = sbr.rel (0) target = $region49
    $region48: #{tpu_custom_call.1} parent=1 // pred_region
      %s692 = ssub.s32 32, 32
      %693 = vsyncadd [#allocation5], %s692
      %s695 = sshll.u32 [#allocation4], 4
      %s696 = int_to_ptr.vmem [resolvable:$true] %s695
      %698 = dma.vmem_to_hbm [thread:$0]  %s696, 32, %s11, [#allocation5]
    $region49: #{tpu_custom_call.1} parent=1 // pred_fallthru
      _
    // Predicated region
    $region50: #{tpu_custom_call.1} parent=1 // pred_check
      _
    $region51: #{tpu_custom_call.1} parent=1 // pred_check_branch
      %700 = sbr.rel (0) target = $region53
    $region52: #{tpu_custom_call.1} parent=1 // pred_region
      %701 = dma.done [#allocation3], 32
    $region53: #{tpu_custom_call.1} parent=1 // pred_fallthru
      _
    // Predicated region
    $region54: #{tpu_custom_call.1} parent=1 // pred_check
      _
    $region55: #{tpu_custom_call.1} parent=1 // pred_check_branch
      %703 = sbr.rel (0) target = $region57
    $region56: #{tpu_custom_call.1} parent=1 // pred_region
      _
    $region57: #{tpu_custom_call.1} parent=1 // pred_fallthru
      _
    // Predicated region
    $region58: #{tpu_custom_call.1} parent=1 // pred_check
      _
    $region59: #{tpu_custom_call.1} parent=1 // pred_check_branch
      %705 = sbr.rel (0) target = $region61
    $region60: #{tpu_custom_call.1} parent=1 // pred_region
      %706 = dma.done [#allocation5], 32
    $region61: #{tpu_custom_call.1} parent=1 // pred_fallthru
      _
    %707 = vsyncpa [#allocation3], 1
    %708 = vsyncpa [#allocation5], 1

</llo_original>
